<compile_context>
chip_gen: v5e
topology: v5e:2x2
jax: 0.10.0
libtpu: 0.0.40
codegen_flags: <defaults>
</compile_context>

<pallas_src>
import functools

import jax
import jax.numpy as jnp
from jax.experimental import pallas as pl
from jax.experimental.pallas import tpu as pltpu


def _round_up(n, m):
    return ((n + m - 1) // m) * m


def _cdiv(a, b):
    return (a + b - 1) // b


def logreg_kernel(w_ref, b_ref, x_ref, o_ref):
    # w_ref: (1, F) f32 in SMEM   (PyTorch weight layout: (out_features, in_features))
    # b_ref: (1, 1) f32 in SMEM
    # x_ref: (F, TR, 128) f32 in VMEM  -- batch packed on (sublane, lane)
    # o_ref: (TR, 128)    f32 in VMEM  -- sublane+lane dense output
    F = x_ref.shape[0]

    # Unrolled per-feature FMA on the VPU; scalar weights broadcast from SMEM.
    z = x_ref[0] * w_ref[0, 0]
    for f in range(1, F):  # trace-time unroll (F = 4)
        z = z + x_ref[f] * w_ref[0, f]
    z = z + b_ref[0, 0]

    # sigmoid(z) == 0.5 * tanh(z / 2) + 0.5 : single EUP op, numerically stable
    # for both signs, no compare / select / divide on the VALU.
    o_ref[...] = 0.5 * jnp.tanh(0.5 * z) + 0.5


def _choose_block_rows(nr, *, cap_rows=2048, target_blocks=8):
    """Pick rows-of-128 per grid step.

    cap_rows=2048 -> 4 MiB x tile + 1 MiB out tile (~10 MiB double buffered),
    safe under the default scoped-VMEM limit on v5e/v6e/v7x.
    target_blocks=8 keeps the parallel grid long enough for v7x's 2 TensorCores.
    """
    if nr <= 8:
        return nr  # full-dim block for tiny batches
    tr = _round_up(_cdiv(nr, target_blocks), 8)
    return max(8, min(cap_rows, tr))


@functools.partial(jax.jit, static_argnames=("block_rows",))
def logistic_regression(x, weight, bias, block_rows=None):
    """x: (N, 4), weight: (1, 4), bias: (1,) -> (N, 1) = sigmoid(x @ W.T + b), all f32."""
    N, F = x.shape
    dtype = jnp.float32
    x = x.astype(dtype)

    # Relayout to feature-major, batch packed on (sublane, lane): (F, NR, 128).
    n_pad = _round_up(N, 128)
    xt = x.T  # (F, N)
    if n_pad != N:  # only a <=127-sample pad; fuses with the transpose copy
        xt = jnp.pad(xt, ((0, 0), (0, n_pad - N)))
    nr = n_pad // 128
    xt = xt.reshape(F, nr, 128)

    tr = block_rows if block_rows is not None else _choose_block_rows(nr)
    grid = (_cdiv(nr, tr),)  # ragged last block handled by Pallas OOB masking

    w2d = weight.reshape(1, F).astype(dtype)
    b2d = bias.reshape(1, 1).astype(dtype)

    out = pl.pallas_call(
        logreg_kernel,
        out_shape=jax.ShapeDtypeStruct((nr, 128), dtype),
        grid=grid,
        in_specs=[
            pl.BlockSpec(memory_space=pltpu.MemorySpace.SMEM),  # weight (1, F): 4 scalars
            pl.BlockSpec(memory_space=pltpu.MemorySpace.SMEM),  # bias   (1, 1): 1 scalar
            pl.BlockSpec((F, tr, 128), lambda i: (0, i, 0)),    # x block, fully packed
        ],
        out_specs=pl.BlockSpec((tr, 128), lambda i: (i, 0)),    # lane+sublane dense out
        compiler_params=pltpu.CompilerParams(
            dimension_semantics=("parallel",),
        ),
    )(w2d, b2d, xt)

    out = out.reshape(n_pad, 1)  # free contiguous reshape
    if n_pad != N:
        out = out[:N]
    return out


if __name__ == "__main__":
    key = jax.random.PRNGKey(0)
    k_x, k_w, k_b = jax.random.split(key, 3)

    F = 4  # features: Age, Weight, BloodSugar, Gender
    bound = 1.0 / jnp.sqrt(jnp.float32(F))
    weight = jax.random.uniform(k_w, (1, F), dtype=jnp.float32, minval=-bound, maxval=bound)
    bias = jax.random.uniform(k_b, (1,), dtype=jnp.float32, minval=-bound, maxval=bound)

    # Small batch consistent with the module (primary check).
    N = 8
    x = jax.random.normal(k_x, (N, F), dtype=jnp.float32)
    out = jax.block_until_ready(logistic_regression(x, weight, bias))
    ref = jax.nn.sigmoid(x @ weight.T + bias)
    assert out.shape == (N, 1)
    assert jnp.allclose(out, ref, atol=1e-5, rtol=1e-5), (out, ref)

    # Secondary check: ragged N (non-multiple of 128), multi-step grid with
    # a ragged last block (exercises the cdiv/OOB path).
    N2 = 4133
    x2 = jax.random.normal(k_x, (N2, F), dtype=jnp.float32)
    out2 = jax.block_until_ready(logistic_regression(x2, weight, bias, block_rows=8))
    ref2 = jax.nn.sigmoid(x2 @ weight.T + bias)
    assert out2.shape == (N2, 1)
    assert jnp.allclose(out2, ref2, atol=1e-5, rtol=1e-5)

    print("KERNEL_OK")
</pallas_src>

<mosaic_0001>
module attributes {stable_mosaic.version = 11 : i64} {
  func.func @logreg_kernel(%arg0: i32, %arg1: memref<1x4xf32, #tpu.memory_space<smem>>, %arg2: memref<1x1xf32, #tpu.memory_space<smem>>, %arg3: memref<4x1x128xf32, #tpu.memory_space<vmem>>, %arg4: memref<1x128xf32, #tpu.memory_space<vmem>>) attributes {dimension_semantics = [#tpu.dimension_semantics<parallel>], iteration_bounds = array<i64: 1>, scalar_prefetch = 0 : i64, scratch_operands = 0 : i64, tpu.core_type = #tpu.core_type<tc>, window_params = [{transform_indices = @transform_0, window_bounds = array<i64: 1, 4>}, {transform_indices = @transform_1, window_bounds = array<i64: 1, 1>}, {transform_indices = @transform_2, window_bounds = array<i64: 4, 1, 128>}, {transform_indices = @transform_3, window_bounds = array<i64: 1, 128>}]} {
    %c0 = arith.constant 0 : index
    %c0_0 = arith.constant 0 : index
    %c0_1 = arith.constant 0 : index
    %0 = vector.load %arg3[%c0, %c0_0, %c0_1] : memref<4x1x128xf32, #tpu.memory_space<vmem>>, vector<1x1x128xf32>
    %1 = vector.shape_cast %0 : vector<1x1x128xf32> to vector<1x128xf32>
    %c0_2 = arith.constant 0 : index
    %c0_3 = arith.constant 0 : index
    %2 = memref.load %arg1[%c0_2, %c0_3] : memref<1x4xf32, #tpu.memory_space<smem>>
    %3 = vector.broadcast %2 : f32 to vector<1x128xf32>
    %4 = arith.mulf %1, %3 : vector<1x128xf32>
    %c1 = arith.constant 1 : index
    %c0_4 = arith.constant 0 : index
    %c0_5 = arith.constant 0 : index
    %5 = vector.load %arg3[%c1, %c0_4, %c0_5] : memref<4x1x128xf32, #tpu.memory_space<vmem>>, vector<1x1x128xf32>
    %6 = vector.shape_cast %5 : vector<1x1x128xf32> to vector<1x128xf32>
    %c0_6 = arith.constant 0 : index
    %c1_7 = arith.constant 1 : index
    %7 = memref.load %arg1[%c0_6, %c1_7] : memref<1x4xf32, #tpu.memory_space<smem>>
    %8 = vector.broadcast %7 : f32 to vector<1x128xf32>
    %9 = arith.mulf %6, %8 : vector<1x128xf32>
    %10 = arith.addf %4, %9 : vector<1x128xf32>
    %c2 = arith.constant 2 : index
    %c0_8 = arith.constant 0 : index
    %c0_9 = arith.constant 0 : index
    %11 = vector.load %arg3[%c2, %c0_8, %c0_9] : memref<4x1x128xf32, #tpu.memory_space<vmem>>, vector<1x1x128xf32>
    %12 = vector.shape_cast %11 : vector<1x1x128xf32> to vector<1x128xf32>
    %c0_10 = arith.constant 0 : index
    %c2_11 = arith.constant 2 : index
    %13 = memref.load %arg1[%c0_10, %c2_11] : memref<1x4xf32, #tpu.memory_space<smem>>
    %14 = vector.broadcast %13 : f32 to vector<1x128xf32>
    %15 = arith.mulf %12, %14 : vector<1x128xf32>
    %16 = arith.addf %10, %15 : vector<1x128xf32>
    %c3 = arith.constant 3 : index
    %c0_12 = arith.constant 0 : index
    %c0_13 = arith.constant 0 : index
    %17 = vector.load %arg3[%c3, %c0_12, %c0_13] : memref<4x1x128xf32, #tpu.memory_space<vmem>>, vector<1x1x128xf32>
    %18 = vector.shape_cast %17 : vector<1x1x128xf32> to vector<1x128xf32>
    %c0_14 = arith.constant 0 : index
    %c3_15 = arith.constant 3 : index
    %19 = memref.load %arg1[%c0_14, %c3_15] : memref<1x4xf32, #tpu.memory_space<smem>>
    %20 = vector.broadcast %19 : f32 to vector<1x128xf32>
    %21 = arith.mulf %18, %20 : vector<1x128xf32>
    %22 = arith.addf %16, %21 : vector<1x128xf32>
    %c0_16 = arith.constant 0 : index
    %c0_17 = arith.constant 0 : index
    %23 = memref.load %arg2[%c0_16, %c0_17] : memref<1x1xf32, #tpu.memory_space<smem>>
    %24 = vector.broadcast %23 : f32 to vector<1x128xf32>
    %25 = arith.addf %22, %24 : vector<1x128xf32>
    %cst = arith.constant 5.000000e-01 : f32
    %26 = vector.broadcast %cst : f32 to vector<1x128xf32>
    %27 = arith.mulf %26, %25 : vector<1x128xf32>
    %28 = math.tanh %27 : vector<1x128xf32>
    %cst_18 = arith.constant 5.000000e-01 : f32
    %29 = vector.broadcast %cst_18 : f32 to vector<1x128xf32>
    %30 = arith.mulf %29, %28 : vector<1x128xf32>
    %cst_19 = arith.constant 5.000000e-01 : f32
    %31 = vector.broadcast %cst_19 : f32 to vector<1x128xf32>
    %32 = arith.addf %30, %31 : vector<1x128xf32>
    %c0_20 = arith.constant 0 : index
    %c0_21 = arith.constant 0 : index
    %33 = vector.load %arg4[%c0_20, %c0_21] : memref<1x128xf32, #tpu.memory_space<vmem>>, vector<1x128xf32>
    tpu.vector_store %arg4[%c0_20, %c0_21], %32 {strides = array<i32>} : memref<1x128xf32, #tpu.memory_space<vmem>>, vector<1x128xf32>,
    return
  }
  func.func @transform_0(%arg0: i32) -> (i32, i32) {
    %c0_i32 = arith.constant 0 : i32
    %c0_i32_0 = arith.constant 0 : i32
    %c0_i32_1 = arith.constant 0 : i32
    return %c0_i32, %c0_i32_0 : i32, i32
  }
  func.func @transform_1(%arg0: i32) -> (i32, i32) {
    %c0_i32 = arith.constant 0 : i32
    %c0_i32_0 = arith.constant 0 : i32
    %c0_i32_1 = arith.constant 0 : i32
    return %c0_i32, %c0_i32_0 : i32, i32
  }
  func.func @transform_2(%arg0: i32) -> (i32, i32, i32) {
    %c0_i32 = arith.constant 0 : i32
    %c0_i32_0 = arith.constant 0 : i32
    %c0_i32_1 = arith.constant 0 : i32
    return %c0_i32, %arg0, %c0_i32_0 : i32, i32, i32
  }
  func.func @transform_3(%arg0: i32) -> (i32, i32) {
    %c0_i32 = arith.constant 0 : i32
    %c0_i32_0 = arith.constant 0 : i32
    return %arg0, %c0_i32 : i32, i32
  }
}

</mosaic_0001>

<llo_original>
// kernel: logistic_regression.1
$region0: #{logistic_regression.1}
  #allocation0 [shape = 'u32[]', space=smem, size = 0x4, offset = 0x4, fixed_abs, tag = 'smem constant byte address 0x4 - core index']
  #allocation1 [shape = 'u32[72,128]{1,0:T(1,128)}', space=vmem, size = 0x9000, scoped, tag = 'internal scratch']
  #allocation2 [shape = 'f32[1,1]{1,0:T(1,128)S(6)}', space=smem, size = 0x200, scoped, tag = 'scoped memory for logistic_regression.1']
  %s0 = inlined_call_operand.vmem [shape: f32[1,4], index: 0, kind: input, shape index: {}]
  %s1 = inlined_call_operand.<no memory space> [shape: f32[1,1], index: 1, kind: input, shape index: {}]
  %s2 = inlined_call_operand.vmem [shape: f32[4,1,128], index: 2, kind: input, shape index: {}]
  %s3 = inlined_call_operand.vmem [shape: f32[1,128], index: 3, kind: output, shape index: {}]
  %s4 = sld [smem:[#allocation0]]
  $region26: #{logistic_regression.1} parent=0
    _
  %s6 = ssub.s32 1, %s4
  %s7 = scalar_select 0, %s6, %s4
  %8 = sst [smem:[#allocation2]] %s1
  $region1: #{logistic_regression.1} parent=0
    #allocation3 [shape = 'u8[512]{0}', space=smem, size = 0x200, scoped, tag = 'input window, operand 0, single buffered']
    #allocation4 [shape = 's32[1]{0}', space=sflag, size = 0x4, scoped, tag = 'scoped memory for logistic_regression.1']
    %9 = vsyncpa [#allocation4], 0
    // Predicated region
    $region2: #{logistic_regression.1} parent=1 // pred_check
      _
    $region3: #{logistic_regression.1} parent=1 // pred_check_branch
      %11 = sbr.rel (0) target = $region5
    $region4: #{logistic_regression.1} parent=1 // pred_region
      %13 = vsyncadd [#allocation4], 0
      %s15 = sshll.u32 %s0, 4
      %s16 = int_to_ptr.vmem [resolvable:$true] %s15
      %18 = dma.vmem_to_smem %s16, 16, [#allocation3], [#allocation4]
    $region5: #{logistic_regression.1} parent=1 // pred_fallthru
      _
    // Predicated region
    $region6: #{logistic_regression.1} parent=1 // pred_check
      _
    $region7: #{logistic_regression.1} parent=1 // pred_check_branch
      %20 = sbr.rel (0) target = $region9
    $region8: #{logistic_regression.1} parent=1 // pred_region
      _
    $region9: #{logistic_regression.1} parent=1 // pred_fallthru
      _
    // Predicated region
    $region10: #{logistic_regression.1} parent=1 // pred_check
      _
    $region11: #{logistic_regression.1} parent=1 // pred_check_branch
      %22 = sbr.rel (0) target = $region13
    $region12: #{logistic_regression.1} parent=1 // pred_region
      _
    $region13: #{logistic_regression.1} parent=1 // pred_fallthru
      _
    // Predicated region
    $region14: #{logistic_regression.1} parent=1 // pred_check
      _
    $region15: #{logistic_regression.1} parent=1 // pred_check_branch
      %24 = sbr.rel (0) target = $region17
    $region16: #{logistic_regression.1} parent=1 // pred_region
      %26 = dma.done [#allocation4], 16
    $region17: #{logistic_regression.1} parent=1 // pred_fallthru
      _
    %27 = sfence
    %v28 = vld [vmem:[%s2] sm:$0x1]
    %s29 = sld [smem:[#allocation3]]
    %v30 = vstv %s29
    %v31 = vmul.f32 %v28, %v30
    %s32 = scalar_lea.vmem %s2, 1
    %v33 = vld [vmem:[%s32] sm:$0x1]
    %s34 = sld [smem:[#allocation3 + $0x1]]
    %v35 = vstv %s34
    %v36 = vmul.f32 %v33, %v35
    %v37 = vadd.f32 %v31, %v36
    %s38 = scalar_lea.vmem %s2, 2
    %v39 = vld [vmem:[%s38] sm:$0x1]
    %s40 = sld [smem:[#allocation3 + $0x2]]
    %v41 = vstv %s40
    %v42 = vmul.f32 %v39, %v41
    %v43 = vadd.f32 %v37, %v42
    %s44 = scalar_lea.vmem %s2, 3
    %v45 = vld [vmem:[%s44] sm:$0x1]
    %s46 = sld [smem:[#allocation3 + $0x3]]
    %v47 = vstv %s46
    %v48 = vmul.f32 %v45, %v47
    %v49 = vadd.f32 %v43, %v48
    %s50 = sld [smem:[#allocation2]]
    %v51 = vstv %s50
    %v52 = vadd.f32 %v49, %v51
    %v53 = vmul.f32 %v52, 0.5
    %v54 = vtanh.pop %v53
    %v55 = vmul.f32 %v54, 0.5
    %v56 = vadd.f32 %v55, 0.5
    %57 = vst [vmem:[%s3] sm:$0x1] %v56
    // Predicated region
    $region18: #{logistic_regression.1} parent=1 // pred_check
      _
    $region19: #{logistic_regression.1} parent=1 // pred_check_branch
      %59 = sbr.rel (0) target = $region21
    $region20: #{logistic_regression.1} parent=1 // pred_region
      _
    $region21: #{logistic_regression.1} parent=1 // pred_fallthru
      _
    // Predicated region
    $region22: #{logistic_regression.1} parent=1 // pred_check
      _
    $region23: #{logistic_regression.1} parent=1 // pred_check_branch
      %61 = sbr.rel (0) target = $region25
    $region24: #{logistic_regression.1} parent=1 // pred_region
      _
    $region25: #{logistic_regression.1} parent=1 // pred_fallthru
      _
    %62 = vsyncpa [#allocation4], 1

</llo_original>
